<compile_context>
chip_gen: v7x
topology: tpu7x:2x2x1
jax: 0.10.0
libtpu: 0.0.40
codegen_flags: <defaults>
</compile_context>

<pallas_src>
import functools

import jax
import jax.numpy as jnp
from jax import lax
from jax.experimental import pallas as pl
from jax.experimental.pallas import tpu as pltpu


def _cmat_kernel(logits_ref, targets_ref, out_ref, acc_ref, *,
                 num_classes, n_valid, acc_lanes):
    """One grid step: per-sample argmax -> joint-index histogram accumulate."""
    C = num_classes
    CC = C * C
    step = pl.program_id(1)
    nsteps = pl.num_programs(1)

    @pl.when(step == 0)
    def _():
        acc_ref[...] = jnp.zeros_like(acc_ref)

    # (C, tile_n): classes on sublanes, samples on the 128-wide lane axis.
    x = logits_ref[...].astype(jnp.float32)
    tn = x.shape[1]

    # argmax over the class (sublane) axis, first-occurrence tie-break.
    # If no lane equals the max (all-NaN column / OOB-garbage tail), pred == CC
    # and the validity gate below drops the sample (no bin aliasing).
    cls = lax.broadcasted_iota(jnp.int32, (C, tn), 0)
    maxv = jnp.max(x, axis=0, keepdims=True)               # (1, tn)
    cand = jnp.where(x == maxv, cls, CC)
    pred = jnp.min(cand, axis=0, keepdims=True)            # (1, tn) int32

    tgt = targets_ref[...]                                 # (1, tn) int32

    # Global sample index of every lane -> mask the ragged tail in-kernel so
    # the wrapper never pads (or copies) the inputs.
    base = (pl.program_id(0) * nsteps + step) * tn
    samp = base + lax.broadcasted_iota(jnp.int32, (1, tn), 1)
    valid = (samp < n_valid) & (pred < C) & (tgt >= 0) & (tgt < C)

    # Joint bin index in [0, CC); invalid samples get -1 (never matches a bin).
    k = jnp.where(valid, tgt * C + pred, -1)               # (1, tn)

    # Lane-resident accumulation: compare/add lane-aligned chunks elementwise
    # into an exact int32 (CC, acc_lanes) accumulator (pure VALU work); the
    # expensive cross-lane reduce happens exactly once, in the epilogue.
    bins = lax.broadcasted_iota(jnp.int32, (CC, acc_lanes), 0)
    part = acc_ref[...]
    for j in range(tn // acc_lanes):
        kj = k[:, j * acc_lanes:(j + 1) * acc_lanes]       # (1, acc_lanes)
        part = part + jnp.where(bins == kj, 1, 0)          # (CC, acc_lanes)
    acc_ref[...] = part

    @pl.when(step == nsteps - 1)
    def _():
        counts = jnp.sum(acc_ref[...], axis=1, keepdims=True)   # (CC, 1), once
        out_ref[...] = counts.astype(out_ref.dtype)


def _round_up(x, m):
    return ((x + m - 1) // m) * m


def _auto_num_splits():
    # 2 TensorCores share one device on v4/v5p (megacore) and v7x; the leading
    # "parallel" grid axis only helps there.  Single-core chips (v5e/v6e, v2/v3)
    # get a plain sequential grid and skip the extra partial + wrapper sum.
    try:
        kind = jax.devices()[0].device_kind.lower()
    except Exception:
        return 1
    if any(s in kind for s in ("v7", "v5p", "v4")):
        return 2
    return 1


@functools.partial(jax.jit, static_argnames=("num_classes", "tile_n", "num_splits"))
def majority_metrics_confusion_matrix(logits, targets, num_classes, *,
                                      tile_n=32768, num_splits=None):
    """Pallas implementation of MajorityMetricsHelper.forward (per-call update)."""
    C = logits.shape[-1]
    assert C == num_classes
    # Joint-histogram path targets small class counts (the common case for
    # patch-level majority labels).  TODO(synk): bf16 one-hot MXU path for C > 16.
    assert C <= 16, "joint-histogram path is intended for num_classes <= 16"
    CC = C * C

    if num_splits is None:
        num_splits = _auto_num_splits()

    logits2d = logits.reshape(-1, C)                    # free reshape, input dtype
    targets1d = targets.reshape(-1).astype(jnp.int32)
    N = logits2d.shape[0]
    if N == 0:
        return jnp.zeros((C, C), jnp.float32)

    # Samples on the lane axis: kernel consumes logits as (C, N).
    # NOTE: this transpose is one extra XLA read+write pass over the logits
    # (kept in the input dtype, no upcast, no padding).  See TODO at top for
    # the grouped-reshape plan that removes it.
    logits_cn = logits2d.T                              # (C, N)
    targets_1n = targets1d.reshape(1, N)                # (1, N)

    # Big lane-aligned tiles (feedback #1); clamp so tiny inputs stay tiny.
    tile_n = max(128, min(int(tile_n),
                          _round_up(pl.cdiv(N, max(1, num_splits)), 128)))
    tile_n = _round_up(tile_n, 128)
    acc_lanes = 512 if tile_n % 512 == 0 else 128

    steps_total = pl.cdiv(N, tile_n)
    num_splits = max(1, min(num_splits, steps_total))
    steps_per_split = pl.cdiv(steps_total, num_splits)
    last_blk = steps_total - 1
    spc = steps_per_split

    def _blk_idx(c, i):
        # Clamp so uneven split/step counts never touch a fully out-of-bounds
        # block; the re-read samples are masked in-kernel by their global index.
        return jnp.minimum(c * spc + i, last_blk)

    kernel = functools.partial(_cmat_kernel, num_classes=C, n_valid=N,
                               acc_lanes=acc_lanes)

    out = pl.pallas_call(
        kernel,
        out_shape=jax.ShapeDtypeStruct((num_splits, CC, 1), jnp.float32),
        grid_spec=pltpu.PrefetchScalarGridSpec(
            num_scalar_prefetch=0,
            grid=(num_splits, steps_per_split),
            in_specs=[
                pl.BlockSpec((C, tile_n), lambda c, i: (0, _blk_idx(c, i))),
                pl.BlockSpec((1, tile_n), lambda c, i: (0, _blk_idx(c, i))),
            ],
            out_specs=pl.BlockSpec((None, CC, 1), lambda c, i: (c, 0, 0)),
            scratch_shapes=[pltpu.VMEM((CC, acc_lanes), jnp.int32)],
        ),
        compiler_params=pltpu.CompilerParams(
            # leading axis: independent partial histograms (sharded across TCs
            # on multi-core chips); trailing axis: sequential reduction into the
            # resident accumulator.
            dimension_semantics=("parallel", "arbitrary"),
        ),
    )(logits_cn, targets_1n)

    cm = out[0, :, 0] if num_splits == 1 else jnp.sum(out[:, :, 0], axis=0)
    return cm.reshape(C, C)


def _reference(logits, targets, num_classes):
    logits2d = logits.reshape(-1, logits.shape[-1]).astype(jnp.float32)
    preds = jnp.argmax(logits2d, axis=-1)            # == argmax(softmax(logits))
    tgts = targets.reshape(-1).astype(jnp.int32)
    onehot_t = jax.nn.one_hot(tgts, num_classes, dtype=jnp.float32)
    onehot_p = jax.nn.one_hot(preds, num_classes, dtype=jnp.float32)
    return onehot_t.T @ onehot_p


if __name__ == "__main__":
    num_classes = 4

    # Test 1: shape implied by the module (batch of patch logits), exact fit.
    batch, patches = 2, 64                            # -> N = 128 samples
    k1, k2 = jax.random.split(jax.random.PRNGKey(0))
    logits = jax.random.normal(k1, (batch, patches, num_classes), dtype=jnp.float32)
    targets = jax.random.randint(k2, (batch, patches), 0, num_classes, dtype=jnp.int32)

    cmat = jax.block_until_ready(
        majority_metrics_confusion_matrix(logits, targets, num_classes))
    ref = _reference(logits, targets, num_classes)
    assert cmat.shape == (num_classes, num_classes)
    assert jnp.array_equal(cmat, ref), (cmat, ref)
    assert float(jnp.sum(cmat)) == batch * patches

    # Test 2: multi-step grid + explicit 2-way split (correct on 1-TC chips too).
    k3, k4 = jax.random.split(jax.random.PRNGKey(1))
    logits2 = jax.random.normal(k3, (2048, num_classes), dtype=jnp.float32)
    targets2 = jax.random.randint(k4, (2048,), 0, num_classes, dtype=jnp.int32)
    cmat2 = jax.block_until_ready(
        majority_metrics_confusion_matrix(logits2, targets2, num_classes,
                                          tile_n=512, num_splits=2))
    assert jnp.array_equal(cmat2, _reference(logits2, targets2, num_classes))

    # Test 3: ragged sample count -- handled by the in-kernel mask, no padding.
    k5, k6 = jax.random.split(jax.random.PRNGKey(2))
    logits3 = jax.random.normal(k5, (1000, num_classes), dtype=jnp.float32)
    targets3 = jax.random.randint(k6, (1000,), 0, num_classes, dtype=jnp.int32)
    cmat3 = jax.block_until_ready(
        majority_metrics_confusion_matrix(logits3, targets3, num_classes))
    assert jnp.array_equal(cmat3, _reference(logits3, targets3, num_classes))
    assert float(jnp.sum(cmat3)) == 1000

    print("KERNEL_OK")
</pallas_src>

<mosaic_0001>
module attributes {stable_mosaic.version = 11 : i64} {
  func.func @_cmat_kernel(%arg0: i32, %arg1: i32, %arg2: memref<4x128xf32, #tpu.memory_space<vmem>>, %arg3: memref<1x128xi32, #tpu.memory_space<vmem>>, %arg4: memref<1x16x1xf32, #tpu.memory_space<vmem>>, %arg5: memref<16x128xi32, #tpu.memory_space<vmem>>) attributes {dimension_semantics = [#tpu.dimension_semantics<parallel>, #tpu.dimension_semantics<arbitrary>], iteration_bounds = array<i64: 1, 1>, scalar_prefetch = 0 : i64, scratch_operands = 1 : i64, tpu.core_type = #tpu.core_type<tc>, window_params = [{transform_indices = @transform_0, window_bounds = array<i64: 4, 128>}, {transform_indices = @transform_1, window_bounds = array<i64: 1, 128>}, {transform_indices = @transform_2, window_bounds = array<i64: 1, 16, 1>}]} {
    %c0_i32 = arith.constant 0 : i32
    %0 = arith.cmpi eq, %arg1, %c0_i32 : i32
    %1 = arith.extui %0 : i1 to i32
    %c0_i32_0 = arith.constant 0 : i32
    %2 = arith.cmpi ne, %1, %c0_i32_0 : i32
    scf.if %2 {
      %c0_i32_17 = arith.constant 0 : i32
      %48 = vector.broadcast %c0_i32_17 : i32 to vector<16x128xi32>
      %c0_18 = arith.constant 0 : index
      %c0_19 = arith.constant 0 : index
      %49 = vector.load %arg5[%c0_18, %c0_19] : memref<16x128xi32, #tpu.memory_space<vmem>>, vector<16x128xi32>
      tpu.vector_store %arg5[%c0_18, %c0_19], %48 {strides = array<i32>} : memref<16x128xi32, #tpu.memory_space<vmem>>, vector<16x128xi32>,
    } else {
    }
    %c0 = arith.constant 0 : index
    %c0_1 = arith.constant 0 : index
    %3 = vector.load %arg2[%c0, %c0_1] : memref<4x128xf32, #tpu.memory_space<vmem>>, vector<4x128xf32>
    %4 = tpu.iota {dimensions = array<i32: 0>} : vector<4x128xi32>
    %cst = arith.constant dense<0xFF800000> : vector<128xf32>
    %5 = vector.multi_reduction <maximumf>, %3, %cst [0] : vector<4x128xf32> to vector<128xf32>
    %6 = vector.shape_cast %5 : vector<128xf32> to vector<1x128xf32>
    %7 = vector.broadcast %6 : vector<1x128xf32> to vector<4x128xf32>
    %8 = arith.cmpf oeq, %3, %7 : vector<4x128xf32>
    %c16_i32 = arith.constant 16 : i32
    %9 = vector.broadcast %c16_i32 : i32 to vector<4x128xi32>
    %10 = arith.select %8, %4, %9 : vector<4x128xi1>, vector<4x128xi32>
    %cst_2 = arith.constant dense<2147483647> : vector<128xi32>
    %11 = vector.multi_reduction <minsi>, %10, %cst_2 [0] : vector<4x128xi32> to vector<128xi32>
    %12 = vector.shape_cast %11 : vector<128xi32> to vector<1x128xi32>
    %c0_3 = arith.constant 0 : index
    %c0_4 = arith.constant 0 : index
    %13 = vector.load %arg3[%c0_3, %c0_4] : memref<1x128xi32, #tpu.memory_space<vmem>>, vector<1x128xi32>
    %c1_i32 = arith.constant 1 : i32
    %14 = arith.muli %arg0, %c1_i32 : i32
    %15 = arith.addi %14, %arg1 : i32
    %c128_i32 = arith.constant 128 : i32
    %16 = arith.muli %15, %c128_i32 : i32
    %17 = tpu.iota {dimensions = array<i32: 1>} : vector<1x128xi32>
    %18 = vector.broadcast %16 : i32 to vector<1x128xi32>
    %19 = arith.addi %18, %17 : vector<1x128xi32>
    %c128_i32_5 = arith.constant 128 : i32
    %20 = vector.broadcast %c128_i32_5 : i32 to vector<1x128xi32>
    %21 = arith.cmpi slt, %19, %20 : vector<1x128xi32>
    %c4_i32 = arith.constant 4 : i32
    %22 = vector.broadcast %c4_i32 : i32 to vector<1x128xi32>
    %23 = arith.cmpi slt, %12, %22 : vector<1x128xi32>
    %24 = arith.andi %21, %23 : vector<1x128xi1>
    %c0_i32_6 = arith.constant 0 : i32
    %25 = vector.broadcast %c0_i32_6 : i32 to vector<1x128xi32>
    %26 = arith.cmpi sge, %13, %25 : vector<1x128xi32>
    %27 = arith.andi %24, %26 : vector<1x128xi1>
    %c4_i32_7 = arith.constant 4 : i32
    %28 = vector.broadcast %c4_i32_7 : i32 to vector<1x128xi32>
    %29 = arith.cmpi slt, %13, %28 : vector<1x128xi32>
    %30 = arith.andi %27, %29 : vector<1x128xi1>
    %c4_i32_8 = arith.constant 4 : i32
    %31 = vector.broadcast %c4_i32_8 : i32 to vector<1x128xi32>
    %32 = arith.muli %13, %31 : vector<1x128xi32>
    %33 = arith.addi %32, %12 : vector<1x128xi32>
    %c-1_i32 = arith.constant -1 : i32
    %34 = vector.broadcast %c-1_i32 : i32 to vector<1x128xi32>
    %35 = arith.select %30, %33, %34 : vector<1x128xi1>, vector<1x128xi32>
    %36 = tpu.iota {dimensions = array<i32: 0>} : vector<16x128xi32>
    %c0_9 = arith.constant 0 : index
    %c0_10 = arith.constant 0 : index
    %37 = vector.load %arg5[%c0_9, %c0_10] : memref<16x128xi32, #tpu.memory_space<vmem>>, vector<16x128xi32>
    %38 = vector.broadcast %35 : vector<1x128xi32> to vector<16x128xi32>
    %39 = arith.cmpi eq, %36, %38 : vector<16x128xi32>
    %c1_i32_11 = arith.constant 1 : i32
    %c0_i32_12 = arith.constant 0 : i32
    %40 = vector.broadcast %c1_i32_11 : i32 to vector<16x128xi32>
    %41 = vector.broadcast %c0_i32_12 : i32 to vector<16x128xi32>
    %42 = arith.select %39, %40, %41 : vector<16x128xi1>, vector<16x128xi32>
    %43 = arith.addi %37, %42 : vector<16x128xi32>
    %c0_13 = arith.constant 0 : index
    %c0_14 = arith.constant 0 : index
    %44 = vector.load %arg5[%c0_13, %c0_14] : memref<16x128xi32, #tpu.memory_space<vmem>>, vector<16x128xi32>
    tpu.vector_store %arg5[%c0_13, %c0_14], %43 {strides = array<i32>} : memref<16x128xi32, #tpu.memory_space<vmem>>, vector<16x128xi32>,
    %c0_i32_15 = arith.constant 0 : i32
    %45 = arith.cmpi eq, %arg1, %c0_i32_15 : i32
    %46 = arith.extui %45 : i1 to i32
    %c0_i32_16 = arith.constant 0 : i32
    %47 = arith.cmpi ne, %46, %c0_i32_16 : i32
    scf.if %47 {
      %c0_17 = arith.constant 0 : index
      %c0_18 = arith.constant 0 : index
      %48 = vector.load %arg5[%c0_17, %c0_18] : memref<16x128xi32, #tpu.memory_space<vmem>>, vector<16x128xi32>
      %cst_19 = arith.constant dense<0> : vector<16xi32>
      %49 = vector.multi_reduction <add>, %48, %cst_19 [1] : vector<16x128xi32> to vector<16xi32>
      %50 = vector.shape_cast %49 : vector<16xi32> to vector<16x1xi32>
      %51 = arith.sitofp %50 : vector<16x1xi32> to vector<16x1xf32>
      %c0_20 = arith.constant 0 : index
      %c0_21 = arith.constant 0 : index
      %c0_22 = arith.constant 0 : index
      %52 = vector.load %arg4[%c0_20, %c0_21, %c0_22] : memref<1x16x1xf32, #tpu.memory_space<vmem>>, vector<1x16x1xf32>
      %53 = vector.shape_cast %52 : vector<1x16x1xf32> to vector<16x1xf32>
      %54 = vector.shape_cast %51 : vector<16x1xf32> to vector<1x16x1xf32>
      tpu.vector_store %arg4[%c0_20, %c0_21, %c0_22], %54 {strides = array<i32>} : memref<1x16x1xf32, #tpu.memory_space<vmem>>, vector<1x16x1xf32>,
    } else {
    }
    return
  }
  func.func @transform_0(%arg0: i32, %arg1: i32) -> (i32, i32) {
    %c1_i32 = arith.constant 1 : i32
    %0 = arith.muli %arg0, %c1_i32 : i32
    %1 = arith.addi %0, %arg1 : i32
    %c0_i32 = arith.constant 0 : i32
    %2 = arith.minsi %1, %c0_i32 : i32
    %c0_i32_0 = arith.constant 0 : i32
    %c0_i32_1 = arith.constant 0 : i32
    return %c0_i32_0, %2 : i32, i32
  }
  func.func @transform_1(%arg0: i32, %arg1: i32) -> (i32, i32) {
    %c1_i32 = arith.constant 1 : i32
    %0 = arith.muli %arg0, %c1_i32 : i32
    %1 = arith.addi %0, %arg1 : i32
    %c0_i32 = arith.constant 0 : i32
    %2 = arith.minsi %1, %c0_i32 : i32
    %c0_i32_0 = arith.constant 0 : i32
    %c0_i32_1 = arith.constant 0 : i32
    return %c0_i32_0, %2 : i32, i32
  }
  func.func @transform_2(%arg0: i32, %arg1: i32) -> (i32, i32, i32) {
    %c0_i32 = arith.constant 0 : i32
    %c0_i32_0 = arith.constant 0 : i32
    %c0_i32_1 = arith.constant 0 : i32
    return %arg0, %c0_i32, %c0_i32_0 : i32, i32, i32
  }
}

</mosaic_0001>

<llo_original>
// kernel: squeeze.1
$region0: #{squeeze.1}
  %s0 = inlined_call_operand.vmem [shape: f32[16], index: 0, kind: input, shape index: {}]
  %s1 = inlined_call_operand.hbm [shape: f32[4,4], index: 1, kind: output, shape index: {}]
  $region1: #{squeeze.1} parent=0
    #allocation0 [shape = 'u8[2048]{0}', space=vmem, size = 0x800, scoped, tag = 'operand span for operand 1']
    #allocation1 [shape = 's32[1]{0}', space=sflag, size = 0x4, scoped, tag = 'scoped memory for squeeze.1']
    #allocation2 [shape = 'u8[4096]{0}', space=vmem, size = 0x1000, scoped, tag = 'scoped mem for output reshape']
    #allocation3 [shape = 'u8[4096]{0}', space=vmem, size = 0x1000, scoped, tag = 'scoped mem for input reshape']
    %2 = vsyncpa [#allocation1], 0
    %s4 = sshllo.u32 0, 1
    %v5 = vld [vmem:[%s0] sm:%s4]
    %6 = vst [vmem:[#allocation3] sm:%s4] %v5
    %v7 = vld [vmem:[#allocation3] sm:$0x1]
    %vm8 = vcmask 31744
    %9 = vst.msk [vmem:[#allocation2] sm:$0x1] %vm8, %v7
    %v10 = vld [vmem:[#allocation3] sm:$0x1]
    %11 = vrot.lane.b32.xlu0 %v10, 124
    %v12 = vpop.permute.xlu0 %11
    %vm13 = vcmask 31744
    %s14 = scalar_lea.vmem [#allocation2], 1
    %15 = vst.msk [vmem:[%s14] sm:$0x1] %vm13, %v12
    %v16 = vld [vmem:[#allocation3] sm:$0x1]
    %17 = vrot.lane.b32.xlu0 %v16, 120
    %v18 = vpop.permute.xlu0 %17
    %vm19 = vcmask 31744
    %s20 = scalar_lea.vmem [#allocation2], 2
    %21 = vst.msk [vmem:[%s20] sm:$0x1] %vm19, %v18
    %v22 = vld [vmem:[#allocation3] sm:$0x1]
    %23 = vrot.lane.b32.xlu0 %v22, 116
    %v24 = vpop.permute.xlu0 %23
    %vm25 = vcmask 31744
    %s26 = scalar_lea.vmem [#allocation2], 3
    %27 = vst.msk [vmem:[%s26] sm:$0x1] %vm25, %v24
    %s29 = sshllo.u32 0, 4
    %v31 = vld [vmem:[#allocation2] sm:%s29]
    %s32 = sshllo.u32 0, 4
    %33 = vst [vmem:[#allocation0] sm:%s32] %v31
    %s35 = ssub.s32 64, 64
    %36 = vsyncadd [#allocation1], %s35
    %s38 = sshll.u32 [#allocation0], 4
    %s39 = int_to_ptr.vmem [resolvable:$true] %s38
    %41 = dma.vmem_to_hbm [thread:$0]  %s39, 64, %s1, [#allocation1]
    %42 = dma.done [#allocation1], 64
    %43 = vsyncpa [#allocation1], 1

// kernel: majority_metrics_confusion_matrix.1
$region0: #{majority_metrics_confusion_matrix.1}
  #allocation0 [shape = 'u32[]', space=smem, size = 0x4, offset = 0x4, fixed_abs, tag = 'smem constant byte address 0x4 - core index']
  #allocation1 [shape = 'u32[144,128]{1,0:T(1,128)}', space=vmem, size = 0x12000, scoped, tag = 'internal scratch']
  #allocation2 [shape = 's32[16,128]{1,0:T(8,128)}', space=vmem, size = 0x2000, scoped, tag = 'scratch operand']
  %s0 = inlined_call_operand.vmem [shape: f32[4,128], index: 0, kind: input, shape index: {}]
  %s1 = inlined_call_operand.vmem [shape: s32[1,128], index: 1, kind: input, shape index: {}]
  %s2 = inlined_call_operand.vmem [shape: f32[1,16,1], index: 2, kind: output, shape index: {}]
  %s3 = sld [smem:[#allocation0]]
  $region26: #{majority_metrics_confusion_matrix.1} parent=0
    _
  %s5 = ssub.s32 1, %s3
  %s6 = scalar_select 0, %s5, %s3
  // Predicated region
  $region2: #{majority_metrics_confusion_matrix.1} parent=0 // pred_check
    _
  $region3: #{majority_metrics_confusion_matrix.1} parent=0 // pred_check_branch
    %8 = sbr.rel (0) target = $region5
  $region4: #{majority_metrics_confusion_matrix.1} parent=0 // pred_region
    %s9 = sadd.s32 0, 0
    %p10 = scmp.lt.s32.totalorder %s9, 0
    %s11 = scalar_select %p10, %s9, 0
    %p12 = scmp.lt.s32.totalorder %s11, 0
    %s13 = scalar_select %p12, %s11, 0
    %s14 = smul.addr %s13, 4
    %s15 = scalar_lea.vmem %s0, %s14
    %s16 = sadd.s32 0, 0
    %p17 = scmp.lt.s32.totalorder %s16, 0
    %s18 = scalar_select %p17, %s16, 0
  $region5: #{majority_metrics_confusion_matrix.1} parent=0 // pred_fallthru
    _
  // Predicated region
  $region6: #{majority_metrics_confusion_matrix.1} parent=0 // pred_check
    _
  $region7: #{majority_metrics_confusion_matrix.1} parent=0 // pred_check_branch
    %20 = sbr.rel (0) target = $region9
  $region8: #{majority_metrics_confusion_matrix.1} parent=0 // pred_region
    %s21 = sadd.s32 0, 0
    %p22 = scmp.lt.s32.totalorder %s21, 0
    %s23 = scalar_select %p22, %s21, 0
    %p24 = scmp.lt.s32.totalorder %s23, 0
    %s25 = scalar_select %p24, %s23, 0
    %s26 = scalar_lea.vmem %s1, %s25
    %s27 = sadd.s32 0, 0
    %p28 = scmp.lt.s32.totalorder %s27, 0
    %s29 = scalar_select %p28, %s27, 0
  $region9: #{majority_metrics_confusion_matrix.1} parent=0 // pred_fallthru
    _
  %s30 = sadd.s32 0, 0
  %p31 = scmp.lt.s32.totalorder %s30, 0
  %s32 = scalar_select %p31, %s30, 0
  %p33 = scmp.lt.s32.totalorder %s32, 0
  %s34 = scalar_select %p33, %s32, 0
  %s35 = smul.addr %s34, 4
  %s36 = scalar_lea.vmem %s0, %s35
  %s37 = sadd.s32 0, 0
  %p38 = scmp.lt.s32.totalorder %s37, 0
  %s39 = scalar_select %p38, %s37, 0
  %p40 = scmp.lt.s32.totalorder %s39, 0
  %s41 = scalar_select %p40, %s39, 0
  %s42 = scalar_lea.vmem %s1, %s41
  %s43 = sadd.s32 0, 0
  %p44 = scmp.lt.s32.totalorder %s43, 0
  %s45 = scalar_select %p44, %s43, 0
  %p46 = scmp.lt.s32.totalorder %s45, 0
  %s47 = scalar_select %p46, %s45, 0
  %s48 = smul.addr %s47, 4
  %s49 = scalar_lea.vmem %s0, %s48
  %s50 = sadd.s32 0, 0
  %p51 = scmp.lt.s32.totalorder %s50, 0
  %s52 = scalar_select %p51, %s50, 0
  %s53 = sadd.s32 0, 0
  %p54 = scmp.lt.s32.totalorder %s53, 0
  %s55 = scalar_select %p54, %s53, 0
  %p56 = scmp.lt.s32.totalorder %s55, 0
  %s57 = scalar_select %p56, %s55, 0
  %s58 = scalar_lea.vmem %s1, %s57
  %s59 = sadd.s32 0, 0
  %p60 = scmp.lt.s32.totalorder %s59, 0
  %s61 = scalar_select %p60, %s59, 0
  %p62 = scmp.eq.s32.totalorder 0, 0
  // Predicated region
  $region10: #{majority_metrics_confusion_matrix.1} parent=0 // pred_check
    %p63 = pneg %p62
  $region11: #{majority_metrics_confusion_matrix.1} parent=0 // pred_check_branch
    %65 = sbr.rel (%p63) target = $region13
  $region12: #{majority_metrics_confusion_matrix.1} parent=0 // pred_region
    %66 = vst [vmem:[#allocation2] sm:$0xff] 0
    %67 = vst [vmem:[#allocation2 + $0x8] sm:$0xff] 0
  $region13: #{majority_metrics_confusion_matrix.1} parent=0 // pred_fallthru
    _
  %v68 = vld [vmem:[%s49] sm:$0xf]
  %v69 = vlaneseq
  %v70 = vshrl.u32 %v69, 7
  %vm71 = vcmask 1043456
  %v72 = vsel %vm71, %v68, -inf
  %v73 = vrot.slane %v72, 4
  %v74 = vmax.f32 %v72, %v73
  %v75 = vrot.slane %v74, 2
  %v76 = vmax.f32 %v74, %v75
  %v77 = vrot.slane %v76, 1
  %v78 = vmax.f32 %v76, %v77
  %vm79 = vcmp.eq.f32.partialorder %v68, %v78
  %v80 = vsel %vm79, %v70, 16
  %v81 = vsel %vm71, %v80, 2147483647
  %v82 = vrot.slane %v81, 4
  %vm83 = vcmp.lt.s32.totalorder %v81, %v82
  %v84 = vsel %vm83, %v81, %v82
  %v85 = vrot.slane %v84, 2
  %vm86 = vcmp.lt.s32.totalorder %v84, %v85
  %v87 = vsel %vm86, %v84, %v85
  %v88 = vrot.slane %v87, 1
  %vm89 = vcmp.lt.s32.totalorder %v87, %v88
  %v90 = vsel %vm89, %v87, %v88
  %v91 = vld [vmem:[%s58] sm:$0x1]
  %s92 = sadd.s32 0, 0
  %s93 = smul.u32 %s92, 128
  %v94 = vlaneseq
  %v95 = vand.u32 %v94, 127
  %v96 = vstv %s93
  %v97 = vadd.s32 %v96, %v95
  %vm98 = vcmp.lt.s32.totalorder %v97, 128
  %vm99 = vcmp.lt.s32.totalorder %v90, 4
  %vm100 = vmand %vm98, %vm99
  %vm101 = vcmp.ge.s32.totalorder %v91, 0
  %vm102 = vmand %vm100, %vm101
  %vm103 = vcmp.lt.s32.totalorder %v91, 4
  %vm104 = vmand %vm102, %vm103
  %v105 = vmul.u32 %v91, 4
  %v106 = vadd.s32 %v105, %v90
  %v107 = vsel %vm104, %v106, 4294967295
  %v108 = vadd.s32 %v70, 8
  %v109 = vld [vmem:[#allocation2] sm:$0xff]
  %v110 = vld [vmem:[#allocation2 + $0x8] sm:$0xff]
  %v111 = vlaneseq
  %v112 = vshrl.u32 %v111, 7
  %v113 = vsub.s32 0, %v112
  %v114 = vrot.slane %v107, %v113
  %vm115 = vcmp.eq.s32.totalorder %v70, %v114
  %vm116 = vcmp.eq.s32.totalorder %v108, %v114
  %v117 = vsel %vm115, 1, 0
  %v118 = vsel %vm116, 1, 0
  %v119 = vadd.s32 %v109, %v117
  %v120 = vadd.s32 %v110, %v118
  %121 = vst [vmem:[#allocation2] sm:$0xff] %v119
  %122 = vst [vmem:[#allocation2 + $0x8] sm:$0xff] %v120
  // Predicated region
  $region14: #{majority_metrics_confusion_matrix.1} parent=0 // pred_check
    %p123 = pneg %p62
  $region15: #{majority_metrics_confusion_matrix.1} parent=0 // pred_check_branch
    %125 = sbr.rel (%p123) target = $region17
  $region16: #{majority_metrics_confusion_matrix.1} parent=0 // pred_region
    %v126 = vld [vmem:[#allocation2] sm:$0xff]
    %v127 = vld [vmem:[#allocation2 + $0x8] sm:$0xff]
    %v128 = vand.u32 %v126, 65535
    %v129 = vshrl.u32 %v126, 16
    %v130 = vcvt.s32.f32 %v128
    %v131 = vcvt.s32.f32 %v129
    %132 = vadd.xlane.f32.xlu0 %v130
    %v133 = vpop.xlane.xlu0 %132
    %134 = vadd.xlane.f32.xlu0 %v131
    %v135 = vpop.xlane.xlu0 %134
    %v136 = vcvt.f32.s32 %v133
    %v137 = vcvt.f32.s32 %v135
    %v138 = vshll.u32 %v137, 16
    %v139 = vadd.s32 %v138, %v136
    %v140 = vand.u32 %v127, 65535
    %v141 = vshrl.u32 %v127, 16
    %v142 = vcvt.s32.f32 %v140
    %v143 = vcvt.s32.f32 %v141
    %144 = vadd.xlane.f32.xlu0 %v142
    %v145 = vpop.xlane.xlu0 %144
    %146 = vadd.xlane.f32.xlu0 %v143
    %v147 = vpop.xlane.xlu0 %146
    %v148 = vcvt.f32.s32 %v145
    %v149 = vcvt.f32.s32 %v147
    %v150 = vshll.u32 %v149, 16
    %v151 = vadd.s32 %v150, %v148
    %v152 = vcvt.s32.f32 %v139
    %v153 = vcvt.s32.f32 %v151
    %vm154 = vcmask 7168
    %155 = vst.msk [vmem:[%s2] sm:$0xff] %vm154, %v152
    %156 = vst.msk [vmem:[%s2 + $0x8] sm:$0xff] %vm154, %v153
  $region17: #{majority_metrics_confusion_matrix.1} parent=0 // pred_fallthru
    _
  // Predicated region
  $region18: #{majority_metrics_confusion_matrix.1} parent=0 // pred_check
    _
  $region19: #{majority_metrics_confusion_matrix.1} parent=0 // pred_check_branch
    %158 = sbr.rel (0) target = $region21
  $region20: #{majority_metrics_confusion_matrix.1} parent=0 // pred_region
    _
  $region21: #{majority_metrics_confusion_matrix.1} parent=0 // pred_fallthru
    _
  // Predicated region
  $region22: #{majority_metrics_confusion_matrix.1} parent=0 // pred_check
    _
  $region23: #{majority_metrics_confusion_matrix.1} parent=0 // pred_check_branch
    %160 = sbr.rel (0) target = $region25
  $region24: #{majority_metrics_confusion_matrix.1} parent=0 // pred_region
    _
  $region25: #{majority_metrics_confusion_matrix.1} parent=0 // pred_fallthru
    _

</llo_original>
